<compile_context>
chip_gen: v6e
topology: v6e:2x2x1
jax: 0.10.0
libtpu: 0.0.40
codegen_flags: <defaults>
</compile_context>

<pallas_src>
import jax
import jax.numpy as jnp
from jax.experimental import pallas as pl
from jax.experimental.pallas import tpu as pltpu


def lren_kernel(x_ref, x0_ref, w1_ref, b1_ref, w2_ref, b2_ref, w3_ref, kbig_ref,
                y_ref, ypred_ref):
    # Tiny weights/biases: fully VMEM-resident, load once per grid step.
    w1 = w1_ref[...]; b1 = b1_ref[...]          # (D, H1), (1, H1)
    w2 = w2_ref[...]; b2 = b2_ref[...]          # (H1, H2), (1, H2)
    w3 = w3_ref[...]                            # (H2, E)

    def encode(v):                              # (M, D) -> (M, E)
        h = jnp.maximum(jnp.dot(v, w1, preferred_element_type=jnp.float32) + b1, 0.0)
        h = jnp.maximum(jnp.dot(h, w2, preferred_element_type=jnp.float32) + b2, 0.0)
        # last layer: no bias, no relu; dropout(p=0.0) == identity
        return jnp.dot(h, w3, preferred_element_type=jnp.float32)

    # ---- Encoder on the (batch*time)-flattened tile: tall-M 2-D MXU matmuls ----
    x2 = x_ref[...]                             # (TN*T, D)
    e2 = encode(x2)                             # (TN*T, E)
    # Single concatenated store of y = [x, g(x)] (no partial-lane split stores,
    # no read-back of the output buffer).
    y_ref[...] = jnp.concatenate([x2, e2], axis=-1).astype(y_ref.dtype)

    # ---- y0 = [x_0, g(x_0)] built from register values (M = TN rows; the
    #      re-encode of the t=0 rows is negligible vs the main encoder and
    #      avoids any strided extraction / output read-back). ----
    x0 = x0_ref[...]                            # (TN, D)
    y0 = jnp.concatenate([x0, encode(x0)], axis=-1)          # (TN, L)

    # ---- Koopman rollout as ONE matmul against precomputed powers:
    #      kbig = [I | kT | kT^2 | ... | kT^(T-1)]  -> lane-dense (TN, T*L) store
    ypred_ref[...] = jnp.dot(y0, kbig_ref[...],
                             preferred_element_type=jnp.float32).astype(ypred_ref.dtype)


def lren_forward(x, params, n_shifts, *, max_batch_tile=512):
    """Returns (y, y_pred) exactly like LREN.forward (return_ko=False)."""
    x = x[:, :n_shifts, :].astype(jnp.float32)   # glue: time slicing
    N, T, D = x.shape
    H1 = params['w1'].shape[1]
    H2 = params['w2'].shape[1]
    E = params['w3'].shape[1]
    L = D + E
    kT = params['kT']

    # Precompute Koopman powers [K^0 | K^1 | ... | K^(T-1)] -> (L, T*L).
    powers = [jnp.eye(L, dtype=jnp.float32)]
    for _ in range(T - 1):
        powers.append(powers[-1] @ kT)
    kbig = jnp.concatenate(powers, axis=1)

    # Batch tiling: cap the per-step working set (few hundred KiB double-buffered,
    # safe for v7x's 64 MiB VMEM and v5e's 16 MiB scoped default).
    if N <= max_batch_tile:
        TN, N_pad = N, N
    else:
        TN = max_batch_tile                      # multiple of 8
        N_pad = ((N + TN - 1) // TN) * TN

    x_pad = x if N_pad == N else jnp.pad(x, ((0, N_pad - N), (0, 0), (0, 0)))
    x_flat = x_pad.reshape(N_pad * T, D)         # row-major merge: free in HBM
    x0 = x_pad[:, 0, :]                          # (N_pad, D)

    def full_spec(shape):
        return pl.BlockSpec(shape, lambda i: (0, 0))

    flops = (2 * N_pad * (T + 1) * (D * H1 + H1 * H2 + H2 * E)
             + 2 * N_pad * L * T * L)
    bytes_accessed = 4 * (x_flat.size + x0.size + kbig.size
                          + N_pad * T * L * 2
                          + params['w1'].size + params['b1'].size
                          + params['w2'].size + params['b2'].size
                          + params['w3'].size)

    y_flat, ypred_flat = pl.pallas_call(
        lren_kernel,
        out_shape=(jax.ShapeDtypeStruct((N_pad * T, L), jnp.float32),
                   jax.ShapeDtypeStruct((N_pad, T * L), jnp.float32)),
        grid_spec=pltpu.PrefetchScalarGridSpec(
            num_scalar_prefetch=0,
            grid=(N_pad // TN,),
            in_specs=[
                pl.BlockSpec((TN * T, D), lambda i: (i, 0)),   # x, (N,T) flattened
                pl.BlockSpec((TN, D), lambda i: (i, 0)),       # x at t = 0
                full_spec(params['w1'].shape), full_spec(params['b1'].shape),
                full_spec(params['w2'].shape), full_spec(params['b2'].shape),
                full_spec(params['w3'].shape), full_spec(kbig.shape),
            ],
            out_specs=(
                pl.BlockSpec((TN * T, L), lambda i: (i, 0)),   # y
                pl.BlockSpec((TN, T * L), lambda i: (i, 0)),   # y_pred (lane-dense)
            ),
        ),
        compiler_params=pltpu.CompilerParams(
            dimension_semantics=("parallel",),
            vmem_limit_bytes=32 * 1024 * 1024,
        ),
        cost_estimate=pl.CostEstimate(flops=int(flops), transcendentals=0,
                                      bytes_accessed=int(bytes_accessed)),
    )(x_flat, x0, params['w1'], params['b1'], params['w2'], params['b2'],
      params['w3'], kbig)

    y = y_flat[:N * T].reshape(N, T, L)
    y_pred = ypred_flat[:N].reshape(N, T, L)
    return y, y_pred


def lren_reference(x, params, n_shifts):
    """Pure-JAX reference mirroring the PyTorch semantics, for validation."""
    x = x[:, :n_shifts, :].astype(jnp.float32)
    h = jax.nn.relu(x @ params['w1'] + params['b1'])
    h = jax.nn.relu(h @ params['w2'] + params['b2'])
    e = h @ params['w3']
    y = jnp.concatenate([x, e], axis=-1)
    preds = [y[:, 0:1, :]]
    for _ in range(n_shifts - 1):
        preds.append(preds[-1] @ params['kT'])
    return y, jnp.concatenate(preds, axis=1)


def init_params(key, enc_shape):
    """Deterministic synthetic weights. enc_shape = [D, H1, H2, E]."""
    D, H1, H2, E = enc_shape
    L = D + E
    ks = jax.random.split(key, 6)
    s = 0.1
    return {
        'w1': s * jax.random.normal(ks[0], (D, H1), jnp.float32),
        'b1': s * jax.random.normal(ks[1], (1, H1), jnp.float32),
        'w2': s * jax.random.normal(ks[2], (H1, H2), jnp.float32),
        'b2': s * jax.random.normal(ks[3], (1, H2), jnp.float32),
        'w3': s * jax.random.normal(ks[4], (H2, E), jnp.float32),
        'kT': s * jax.random.normal(ks[5], (L, L), jnp.float32),  # K.weight.T
    }


if __name__ == "__main__":
    key = jax.random.PRNGKey(0)
    k_x, k_p = jax.random.split(key)

    enc_shape = [4, 32, 32, 16]   # params['enc_shape']
    n_shifts = 8                  # params['n_shifts']
    N, T_total, D = 2, 10, enc_shape[0]

    x = jax.random.normal(k_x, (N, T_total, D), jnp.float32)
    params = init_params(k_p, enc_shape)

    y, y_pred = lren_forward(x, params, n_shifts)
    jax.block_until_ready((y, y_pred))

    y_ref, y_pred_ref = lren_reference(x, params, n_shifts)
    assert jnp.allclose(y, y_ref, atol=2e-5, rtol=1e-4)
    assert jnp.allclose(y_pred, y_pred_ref, atol=2e-5, rtol=1e-4)

    print("KERNEL_OK")
</pallas_src>

<mosaic_0001>
module attributes {stable_mosaic.version = 11 : i64} {
  func.func @lren_kernel(%arg0: i32, %arg1: memref<16x4xf32, #tpu.memory_space<vmem>>, %arg2: memref<2x4xf32, #tpu.memory_space<vmem>>, %arg3: memref<4x32xf32, #tpu.memory_space<vmem>>, %arg4: memref<1x32xf32, #tpu.memory_space<vmem>>, %arg5: memref<32x32xf32, #tpu.memory_space<vmem>>, %arg6: memref<1x32xf32, #tpu.memory_space<vmem>>, %arg7: memref<32x16xf32, #tpu.memory_space<vmem>>, %arg8: memref<20x160xf32, #tpu.memory_space<vmem>>, %arg9: memref<16x20xf32, #tpu.memory_space<vmem>>, %arg10: memref<2x160xf32, #tpu.memory_space<vmem>>) attributes {dimension_semantics = [#tpu.dimension_semantics<parallel>], iteration_bounds = array<i64: 1>, scalar_prefetch = 0 : i64, scratch_operands = 0 : i64, tpu.core_type = #tpu.core_type<tc>, window_params = [{transform_indices = @transform_0, window_bounds = array<i64: 16, 4>}, {transform_indices = @transform_1, window_bounds = array<i64: 2, 4>}, {pipeline_mode = #tpu.pipeline_mode<synchronous>, transform_indices = @transform_2, window_bounds = array<i64: 4, 32>}, {pipeline_mode = #tpu.pipeline_mode<synchronous>, transform_indices = @transform_3, window_bounds = array<i64: 1, 32>}, {pipeline_mode = #tpu.pipeline_mode<synchronous>, transform_indices = @transform_4, window_bounds = array<i64: 32, 32>}, {pipeline_mode = #tpu.pipeline_mode<synchronous>, transform_indices = @transform_5, window_bounds = array<i64: 1, 32>}, {pipeline_mode = #tpu.pipeline_mode<synchronous>, transform_indices = @transform_6, window_bounds = array<i64: 32, 16>}, {pipeline_mode = #tpu.pipeline_mode<synchronous>, transform_indices = @transform_7, window_bounds = array<i64: 20, 160>}, {transform_indices = @transform_8, window_bounds = array<i64: 16, 20>}, {transform_indices = @transform_9, window_bounds = array<i64: 2, 160>}]} {
    %c0 = arith.constant 0 : index
    %c0_0 = arith.constant 0 : index
    %0 = vector.load %arg3[%c0, %c0_0] : memref<4x32xf32, #tpu.memory_space<vmem>>, vector<4x32xf32>
    %c0_1 = arith.constant 0 : index
    %c0_2 = arith.constant 0 : index
    %1 = vector.load %arg4[%c0_1, %c0_2] : memref<1x32xf32, #tpu.memory_space<vmem>>, vector<1x32xf32>
    %c0_3 = arith.constant 0 : index
    %c0_4 = arith.constant 0 : index
    %2 = vector.load %arg5[%c0_3, %c0_4] : memref<32x32xf32, #tpu.memory_space<vmem>>, vector<32x32xf32>
    %c0_5 = arith.constant 0 : index
    %c0_6 = arith.constant 0 : index
    %3 = vector.load %arg6[%c0_5, %c0_6] : memref<1x32xf32, #tpu.memory_space<vmem>>, vector<1x32xf32>
    %c0_7 = arith.constant 0 : index
    %c0_8 = arith.constant 0 : index
    %4 = vector.load %arg7[%c0_7, %c0_8] : memref<32x16xf32, #tpu.memory_space<vmem>>, vector<32x16xf32>
    %c0_9 = arith.constant 0 : index
    %c0_10 = arith.constant 0 : index
    %5 = vector.load %arg1[%c0_9, %c0_10] : memref<16x4xf32, #tpu.memory_space<vmem>>, vector<16x4xf32>
    %cst = arith.constant dense<0.000000e+00> : vector<16x32xf32>
    %6 = tpu.matmul %5, %0, %cst {dimension_numbers = #tpu.dot_dimension_numbers<[1], [0], [0], [1], [0, 0, 1, 1], [], []>} : vector<16x4xf32>, vector<4x32xf32>, vector<16x32xf32> -> vector<16x32xf32>
    %7 = vector.broadcast %1 : vector<1x32xf32> to vector<16x32xf32>
    %8 = arith.addf %6, %7 : vector<16x32xf32>
    %cst_11 = arith.constant 0.000000e+00 : f32
    %9 = vector.broadcast %cst_11 : f32 to vector<16x32xf32>
    %10 = arith.maximumf %8, %9 : vector<16x32xf32>
    %cst_12 = arith.constant dense<0.000000e+00> : vector<16x32xf32>
    %11 = tpu.matmul %10, %2, %cst_12 {dimension_numbers = #tpu.dot_dimension_numbers<[1], [0], [0], [1], [0, 0, 1, 1], [], []>} : vector<16x32xf32>, vector<32x32xf32>, vector<16x32xf32> -> vector<16x32xf32>
    %12 = vector.broadcast %3 : vector<1x32xf32> to vector<16x32xf32>
    %13 = arith.addf %11, %12 : vector<16x32xf32>
    %cst_13 = arith.constant 0.000000e+00 : f32
    %14 = vector.broadcast %cst_13 : f32 to vector<16x32xf32>
    %15 = arith.maximumf %13, %14 : vector<16x32xf32>
    %cst_14 = arith.constant dense<0.000000e+00> : vector<16x16xf32>
    %16 = tpu.matmul %15, %4, %cst_14 {dimension_numbers = #tpu.dot_dimension_numbers<[1], [0], [0], [1], [0, 0, 1, 1], [], []>} : vector<16x32xf32>, vector<32x16xf32>, vector<16x16xf32> -> vector<16x16xf32>
    %17 = tpu.concatenate %5, %16 in 1 : vector<16x4xf32>, vector<16x16xf32> -> vector<16x20xf32>
    %c0_15 = arith.constant 0 : index
    %c0_16 = arith.constant 0 : index
    %18 = vector.load %arg9[%c0_15, %c0_16] : memref<16x20xf32, #tpu.memory_space<vmem>>, vector<16x20xf32>
    tpu.vector_store %arg9[%c0_15, %c0_16], %17 {strides = array<i32>} : memref<16x20xf32, #tpu.memory_space<vmem>>, vector<16x20xf32>,
    %c0_17 = arith.constant 0 : index
    %c0_18 = arith.constant 0 : index
    %19 = vector.load %arg2[%c0_17, %c0_18] : memref<2x4xf32, #tpu.memory_space<vmem>>, vector<2x4xf32>
    %cst_19 = arith.constant dense<0.000000e+00> : vector<2x32xf32>
    %20 = tpu.matmul %19, %0, %cst_19 {dimension_numbers = #tpu.dot_dimension_numbers<[1], [0], [0], [1], [0, 0, 1, 1], [], []>} : vector<2x4xf32>, vector<4x32xf32>, vector<2x32xf32> -> vector<2x32xf32>
    %21 = vector.broadcast %1 : vector<1x32xf32> to vector<2x32xf32>
    %22 = arith.addf %20, %21 : vector<2x32xf32>
    %cst_20 = arith.constant 0.000000e+00 : f32
    %23 = vector.broadcast %cst_20 : f32 to vector<2x32xf32>
    %24 = arith.maximumf %22, %23 : vector<2x32xf32>
    %cst_21 = arith.constant dense<0.000000e+00> : vector<2x32xf32>
    %25 = tpu.matmul %24, %2, %cst_21 {dimension_numbers = #tpu.dot_dimension_numbers<[1], [0], [0], [1], [0, 0, 1, 1], [], []>} : vector<2x32xf32>, vector<32x32xf32>, vector<2x32xf32> -> vector<2x32xf32>
    %26 = vector.broadcast %3 : vector<1x32xf32> to vector<2x32xf32>
    %27 = arith.addf %25, %26 : vector<2x32xf32>
    %cst_22 = arith.constant 0.000000e+00 : f32
    %28 = vector.broadcast %cst_22 : f32 to vector<2x32xf32>
    %29 = arith.maximumf %27, %28 : vector<2x32xf32>
    %cst_23 = arith.constant dense<0.000000e+00> : vector<2x16xf32>
    %30 = tpu.matmul %29, %4, %cst_23 {dimension_numbers = #tpu.dot_dimension_numbers<[1], [0], [0], [1], [0, 0, 1, 1], [], []>} : vector<2x32xf32>, vector<32x16xf32>, vector<2x16xf32> -> vector<2x16xf32>
    %31 = tpu.concatenate %19, %30 in 1 : vector<2x4xf32>, vector<2x16xf32> -> vector<2x20xf32>
    %c0_24 = arith.constant 0 : index
    %c0_25 = arith.constant 0 : index
    %32 = vector.load %arg8[%c0_24, %c0_25] : memref<20x160xf32, #tpu.memory_space<vmem>>, vector<20x160xf32>
    %cst_26 = arith.constant dense<0.000000e+00> : vector<2x160xf32>
    %33 = tpu.matmul %31, %32, %cst_26 {dimension_numbers = #tpu.dot_dimension_numbers<[1], [0], [0], [1], [0, 0, 1, 1], [], []>} : vector<2x20xf32>, vector<20x160xf32>, vector<2x160xf32> -> vector<2x160xf32>
    %c0_27 = arith.constant 0 : index
    %c0_28 = arith.constant 0 : index
    %34 = vector.load %arg10[%c0_27, %c0_28] : memref<2x160xf32, #tpu.memory_space<vmem>>, vector<2x160xf32>
    tpu.vector_store %arg10[%c0_27, %c0_28], %33 {strides = array<i32>} : memref<2x160xf32, #tpu.memory_space<vmem>>, vector<2x160xf32>,
    return
  }
  func.func @transform_0(%arg0: i32) -> (i32, i32) {
    %c0_i32 = arith.constant 0 : i32
    %c0_i32_0 = arith.constant 0 : i32
    return %arg0, %c0_i32 : i32, i32
  }
  func.func @transform_1(%arg0: i32) -> (i32, i32) {
    %c0_i32 = arith.constant 0 : i32
    %c0_i32_0 = arith.constant 0 : i32
    return %arg0, %c0_i32 : i32, i32
  }
  func.func @transform_2(%arg0: i32) -> (i32, i32) {
    %c0_i32 = arith.constant 0 : i32
    %c0_i32_0 = arith.constant 0 : i32
    %c0_i32_1 = arith.constant 0 : i32
    return %c0_i32, %c0_i32_0 : i32, i32
  }
  func.func @transform_3(%arg0: i32) -> (i32, i32) {
    %c0_i32 = arith.constant 0 : i32
    %c0_i32_0 = arith.constant 0 : i32
    %c0_i32_1 = arith.constant 0 : i32
    return %c0_i32, %c0_i32_0 : i32, i32
  }
  func.func @transform_4(%arg0: i32) -> (i32, i32) {
    %c0_i32 = arith.constant 0 : i32
    %c0_i32_0 = arith.constant 0 : i32
    %c0_i32_1 = arith.constant 0 : i32
    return %c0_i32, %c0_i32_0 : i32, i32
  }
  func.func @transform_5(%arg0: i32) -> (i32, i32) {
    %c0_i32 = arith.constant 0 : i32
    %c0_i32_0 = arith.constant 0 : i32
    %c0_i32_1 = arith.constant 0 : i32
    return %c0_i32, %c0_i32_0 : i32, i32
  }
  func.func @transform_6(%arg0: i32) -> (i32, i32) {
    %c0_i32 = arith.constant 0 : i32
    %c0_i32_0 = arith.constant 0 : i32
    %c0_i32_1 = arith.constant 0 : i32
    return %c0_i32, %c0_i32_0 : i32, i32
  }
  func.func @transform_7(%arg0: i32) -> (i32, i32) {
    %c0_i32 = arith.constant 0 : i32
    %c0_i32_0 = arith.constant 0 : i32
    %c0_i32_1 = arith.constant 0 : i32
    return %c0_i32, %c0_i32_0 : i32, i32
  }
  func.func @transform_8(%arg0: i32) -> (i32, i32) {
    %c0_i32 = arith.constant 0 : i32
    %c0_i32_0 = arith.constant 0 : i32
    return %arg0, %c0_i32 : i32, i32
  }
  func.func @transform_9(%arg0: i32) -> (i32, i32) {
    %c0_i32 = arith.constant 0 : i32
    %c0_i32_0 = arith.constant 0 : i32
    return %arg0, %c0_i32 : i32, i32
  }
}

</mosaic_0001>

<llo_original>
// kernel: tpu_custom_call.1
$region0: #{tpu_custom_call.1}
  #allocation0 [shape = 'u32[]', space=smem, size = 0x4, offset = 0x4, fixed_abs, tag = 'smem constant byte address 0x4 - core index']
  #allocation1 [shape = 'u32[144,128]{1,0:T(1,128)}', space=vmem, size = 0x12000, scoped, tag = 'internal scratch']
  %s0 = inlined_call_operand.vmem [shape: f32[16,4], index: 0, kind: input, shape index: {}]
  %s1 = inlined_call_operand.hbm [shape: f32[2,4], index: 1, kind: input, shape index: {}]
  %s2 = inlined_call_operand.hbm [shape: f32[4,32], index: 2, kind: input, shape index: {}]
  %s3 = inlined_call_operand.hbm [shape: f32[1,32], index: 3, kind: input, shape index: {}]
  %s4 = inlined_call_operand.vmem [shape: f32[32,32], index: 4, kind: input, shape index: {}]
  %s5 = inlined_call_operand.hbm [shape: f32[1,32], index: 5, kind: input, shape index: {}]
  %s6 = inlined_call_operand.vmem [shape: f32[32,16], index: 6, kind: input, shape index: {}]
  %s7 = inlined_call_operand.vmem [shape: f32[20,160], index: 7, kind: input, shape index: {}]
  %s8 = inlined_call_operand.hbm [shape: f32[16,20], index: 8, kind: output, shape index: {0}]
  %s9 = inlined_call_operand.hbm [shape: f32[2,160], index: 9, kind: output, shape index: {1}]
  %10 = xla_tuple %s8, %s9
  %s11 = sld [smem:[#allocation0]]
  $region66: #{tpu_custom_call.1} parent=0
    _
  %s13 = ssub.s32 1, %s11
  %s14 = scalar_select 0, %s13, %s11
  $region1: #{tpu_custom_call.1} parent=0
    #allocation2 [shape = 'u8[1024]{0}', space=vmem, size = 0x400, scoped, tag = 'input window, operand 1, single buffered']
    #allocation3 [shape = 's32[1]{0}', space=sflag, size = 0x4, scoped, tag = 'scoped memory for tpu_custom_call.1']
    #allocation4 [shape = 's32[1]{0}', space=sflag, size = 0x4, scoped, tag = 'scoped memory for tpu_custom_call.1']
    #allocation5 [shape = 'u8[2048]{0}', space=vmem, size = 0x800, scoped, tag = 'input window, operand 2, single buffered']
    #allocation6 [shape = 's32[1]{0}', space=sflag, size = 0x4, scoped, tag = 'scoped memory for tpu_custom_call.1']
    #allocation7 [shape = 'u8[512]{0}', space=vmem, size = 0x400, scoped, tag = 'input window, operand 3, single buffered']
    #allocation8 [shape = 'u8[512]{0}', space=vmem, size = 0x400, scoped, tag = 'input window, operand 5, single buffered']
    #allocation9 [shape = 's32[1]{0}', space=sflag, size = 0x4, scoped, tag = 'scoped memory for tpu_custom_call.1']
    #allocation10 [shape = 'u8[8192]{0}', space=vmem, size = 0x2000, scoped, tag = 'output window, operand 0, single buffered']
    #allocation11 [shape = 'u8[2048]{0}', space=vmem, size = 0x800, scoped, tag = 'output window, operand 1, single buffered']
    #allocation12 [shape = 's32[1]{0}', space=sflag, size = 0x4, scoped, tag = 'scoped memory for tpu_custom_call.1']
    %15 = vsyncpa [#allocation3], 0
    %16 = vsyncpa [#allocation6], 0
    %17 = vsyncpa [#allocation9], 0
    %18 = vsyncpa [#allocation4], 0
    %19 = vsyncpa [#allocation12], 0
    // Predicated region
    $region2: #{tpu_custom_call.1} parent=1 // pred_check
      _
    $region3: #{tpu_custom_call.1} parent=1 // pred_check_branch
      %21 = sbr.rel (0) target = $region5
    $region4: #{tpu_custom_call.1} parent=1 // pred_region
      _
    $region5: #{tpu_custom_call.1} parent=1 // pred_fallthru
      _
    // Predicated region
    $region6: #{tpu_custom_call.1} parent=1 // pred_check
      _
    $region7: #{tpu_custom_call.1} parent=1 // pred_check_branch
      %23 = sbr.rel (0) target = $region9
    $region8: #{tpu_custom_call.1} parent=1 // pred_region
      %s25 = ssub.s32 32, 32
      %26 = vsyncadd [#allocation3], %s25
      %s28 = sshll.u32 [#allocation2], 4
      %s29 = int_to_ptr.vmem [resolvable:$true] %s28
      %31 = dma.hbm_to_vmem [thread:$0]  %s1, 32, %s29, [#allocation3]
    $region9: #{tpu_custom_call.1} parent=1 // pred_fallthru
      _
    // Predicated region
    $region10: #{tpu_custom_call.1} parent=1 // pred_check
      _
    $region11: #{tpu_custom_call.1} parent=1 // pred_check_branch
      %33 = sbr.rel (0) target = $region13
    $region12: #{tpu_custom_call.1} parent=1 // pred_region
      %s35 = ssub.s32 64, 64
      %36 = vsyncadd [#allocation6], %s35
      %s38 = sshll.u32 [#allocation5], 4
      %s39 = int_to_ptr.vmem [resolvable:$true] %s38
      %41 = dma.hbm_to_vmem [thread:$0]  %s2, 64, %s39, [#allocation6]
    $region13: #{tpu_custom_call.1} parent=1 // pred_fallthru
      _
    // Predicated region
    $region14: #{tpu_custom_call.1} parent=1 // pred_check
      _
    $region15: #{tpu_custom_call.1} parent=1 // pred_check_branch
      %43 = sbr.rel (0) target = $region17
    $region16: #{tpu_custom_call.1} parent=1 // pred_region
      %s45 = ssub.s32 16, 16
      %46 = vsyncadd [#allocation6], %s45
      %s48 = sshll.u32 [#allocation7], 4
      %s49 = int_to_ptr.vmem [resolvable:$true] %s48
      %51 = dma.hbm_to_vmem [thread:$0]  %s3, 16, %s49, [#allocation6]
    $region17: #{tpu_custom_call.1} parent=1 // pred_fallthru
      _
    // Predicated region
    $region18: #{tpu_custom_call.1} parent=1 // pred_check
      _
    $region19: #{tpu_custom_call.1} parent=1 // pred_check_branch
      %53 = sbr.rel (0) target = $region21
    $region20: #{tpu_custom_call.1} parent=1 // pred_region
      _
    $region21: #{tpu_custom_call.1} parent=1 // pred_fallthru
      _
    // Predicated region
    $region22: #{tpu_custom_call.1} parent=1 // pred_check
      _
    $region23: #{tpu_custom_call.1} parent=1 // pred_check_branch
      %55 = sbr.rel (0) target = $region25
    $region24: #{tpu_custom_call.1} parent=1 // pred_region
      %s57 = ssub.s32 16, 16
      %58 = vsyncadd [#allocation9], %s57
      %s60 = sshll.u32 [#allocation8], 4
      %s61 = int_to_ptr.vmem [resolvable:$true] %s60
      %63 = dma.hbm_to_vmem [thread:$0]  %s5, 16, %s61, [#allocation9]
    $region25: #{tpu_custom_call.1} parent=1 // pred_fallthru
      _
    // Predicated region
    $region26: #{tpu_custom_call.1} parent=1 // pred_check
      _
    $region27: #{tpu_custom_call.1} parent=1 // pred_check_branch
      %65 = sbr.rel (0) target = $region29
    $region28: #{tpu_custom_call.1} parent=1 // pred_region
      _
    $region29: #{tpu_custom_call.1} parent=1 // pred_fallthru
      _
    // Predicated region
    $region30: #{tpu_custom_call.1} parent=1 // pred_check
      _
    $region31: #{tpu_custom_call.1} parent=1 // pred_check_branch
      %67 = sbr.rel (0) target = $region33
    $region32: #{tpu_custom_call.1} parent=1 // pred_region
      _
    $region33: #{tpu_custom_call.1} parent=1 // pred_fallthru
      _
    // Predicated region
    $region34: #{tpu_custom_call.1} parent=1 // pred_check
      _
    $region35: #{tpu_custom_call.1} parent=1 // pred_check_branch
      %69 = sbr.rel (0) target = $region37
    $region36: #{tpu_custom_call.1} parent=1 // pred_region
      %70 = dma.done [#allocation3], 32
    $region37: #{tpu_custom_call.1} parent=1 // pred_fallthru
      _
    // Predicated region
    $region38: #{tpu_custom_call.1} parent=1 // pred_check
      _
    $region39: #{tpu_custom_call.1} parent=1 // pred_check_branch
      %72 = sbr.rel (0) target = $region41
    $region40: #{tpu_custom_call.1} parent=1 // pred_region
      %73 = dma.done [#allocation6], 64
    $region41: #{tpu_custom_call.1} parent=1 // pred_fallthru
      _
    // Predicated region
    $region42: #{tpu_custom_call.1} parent=1 // pred_check
      _
    $region43: #{tpu_custom_call.1} parent=1 // pred_check_branch
      %75 = sbr.rel (0) target = $region45
    $region44: #{tpu_custom_call.1} parent=1 // pred_region
      %76 = dma.done [#allocation6], 16
    $region45: #{tpu_custom_call.1} parent=1 // pred_fallthru
      _
    // Predicated region
    $region46: #{tpu_custom_call.1} parent=1 // pred_check
      _
    $region47: #{tpu_custom_call.1} parent=1 // pred_check_branch
      %78 = sbr.rel (0) target = $region49
    $region48: #{tpu_custom_call.1} parent=1 // pred_region
      %79 = dma.done [#allocation9], 16
    $region49: #{tpu_custom_call.1} parent=1 // pred_fallthru
      _
    %v80 = vld [vmem:[#allocation5] sm:$0xf]
    %v81 = vld [vmem:[#allocation7] sm:$0x1]
    %v82 = vld [vmem:[%s4] sm:$0xff]
    %v83 = vld [vmem:[%s4 + $0x8] sm:$0xff]
    %v84 = vld [vmem:[%s4 + $0x10] sm:$0xff]
    %v85 = vld [vmem:[%s4 + $0x18] sm:$0xff]
    %v86 = vld [vmem:[#allocation8] sm:$0x1]
    %v87 = vld [vmem:[%s6] sm:$0xff]
    %v88 = vld [vmem:[%s6 + $0x8] sm:$0xff]
    %v89 = vld [vmem:[%s6 + $0x10] sm:$0xff]
    %v90 = vld [vmem:[%s6 + $0x18] sm:$0xff]
    %v91 = vld [vmem:[%s0] sm:$0xff]
    %v92 = vld [vmem:[%s0 + $0x8] sm:$0xff]
    %v94 = vlaneseq
    %v95 = vshrl.u32 %v94, 7
    %v96 = vsub.s32 0, %v95
    %v97 = vrot.slane %v81, %v96
    %vm99 = vcmask 31744
    %v101 = vsel %vm99, %v91, 0
    %v104 = vsel %vm99, %v92, 0
    %vm106 = vcmask 1043456
    %v108 = vsel %vm106, %v80, 0
    %110 = vmatprep.subr.mxu0 0.0
    %111 = vmatpush1.msra.mxu0 0.0
    %112 = vmatprep.subr.mxu0 0.0
    %113 = vmatpush1.msra.mxu0 0.0
    %114 = vmatprep.subr.mxu0 0.0
    %115 = vmatpush1.msra.mxu0 0.0
    %116 = vmatprep.subr.mxu0 0.0
    %117 = vmatpush1.msra.mxu0 0.0
    %118 = vmatprep.subr.mxu0 0.0
    %119 = vmatpush1.msra.mxu0 0.0
    %120 = vmatprep.subr.mxu0 0.0
    %121 = vmatpush1.msra.mxu0 0.0
    %122 = vmatprep.subr.mxu0 0.0
    %123 = vmatpush1.msra.mxu0 0.0
    %124 = vmatprep.subr.mxu0 0.0
    %125 = vmatpush1.msra.mxu0 0.0
    %126 = vmatprep.subr.mxu0 0.0
    %127 = vmatpush1.msra.mxu0 0.0
    %128 = vmatprep.subr.mxu0 0.0
    %129 = vmatpush1.msra.mxu0 0.0
    %130 = vmatprep.subr.mxu0 0.0
    %131 = vmatpush1.msra.mxu0 0.0
    %132 = vmatprep.subr.mxu0 0.0
    %133 = vmatpush1.msra.mxu0 0.0
    %134 = vmatprep.subr.mxu0 0.0
    %135 = vmatpush1.msra.mxu0 0.0
    %136 = vmatprep.subr.mxu0 0.0
    %137 = vmatpush1.msra.mxu0 0.0
    %138 = vmatprep.subr.mxu0 0.0
    %139 = vmatpush1.msra.mxu0 0.0
    %140 = vmatprep.subr.mxu0 0.0
    %141 = vmatpush1.msra.mxu0 %v108
    %142 = vmatprep.subr.mxu0 0.0
    %143 = vmatpush2.msra.mxu0 0.0
    %144 = vmatprep.subr.mxu0 0.0
    %145 = vmatpush2.msra.mxu0 0.0
    %146 = vmatprep.subr.mxu0 0.0
    %147 = vmatpush2.msra.mxu0 0.0
    %148 = vmatprep.subr.mxu0 0.0
    %149 = vmatpush2.msra.mxu0 0.0
    %150 = vmatprep.subr.mxu0 0.0
    %151 = vmatpush2.msra.mxu0 0.0
    %152 = vmatprep.subr.mxu0 0.0
    %153 = vmatpush2.msra.mxu0 0.0
    %154 = vmatprep.subr.mxu0 0.0
    %155 = vmatpush2.msra.mxu0 0.0
    %156 = vmatprep.subr.mxu0 0.0
    %157 = vmatpush2.msra.mxu0 0.0
    %158 = vmatprep.subr.mxu0 0.0
    %159 = vmatpush2.msra.mxu0 0.0
    %160 = vmatprep.subr.mxu0 0.0
    %161 = vmatpush2.msra.mxu0 0.0
    %162 = vmatprep.subr.mxu0 0.0
    %163 = vmatpush2.msra.mxu0 0.0
    %164 = vmatprep.subr.mxu0 0.0
    %165 = vmatpush2.msra.mxu0 0.0
    %166 = vmatprep.subr.mxu0 0.0
    %167 = vmatpush2.msra.mxu0 0.0
    %168 = vmatprep.subr.mxu0 0.0
    %169 = vmatpush2.msra.mxu0 0.0
    %170 = vmatprep.subr.mxu0 0.0
    %171 = vmatpush2.msra.mxu0 0.0
    %172 = vmatprep.subr.mxu0 0.0
    %173 = vmatpush2.msra.mxu0 0.0
    %174 = vmatprep.mubr.f32.mxu0 0.0
    %175 = vmatmul.mubr.f32.gmra.mxu0 %v101
    %v176 = vpop.f32.mrf.mxu0
    %v177 = vadd.f32 %v97, %v176
    %v178 = vpop.f32.mrf.mxu0
    %179 = vmatprep.mubr.f32.mxu0 0.0
    %180 = vmatmul.mubr.f32.gmra.mxu0 %v104
    %v181 = vpop.f32.mrf.mxu0
    %v182 = vadd.f32 %v97, %v181
    %v183 = vpop.f32.mrf.mxu0
    %184 = vdwg.mxu0
    %v185 = vmax.f32 %v177, 0.0
    %v186 = vmax.f32 %v182, 0.0
    %v188 = vlaneseq
    %v189 = vshrl.u32 %v188, 7
    %v190 = vsub.s32 0, %v189
    %v191 = vrot.slane %v86, %v190
    %vm193 = vcmask 261120
    %v195 = vsel %vm193, %v185, 0
    %v198 = vsel %vm193, %v186, 0
    %200 = vmatprep.subr.mxu0 0.0
    %201 = vmatpush1.msra.mxu0 0.0
    %202 = vmatprep.subr.mxu0 0.0
    %203 = vmatpush1.msra.mxu0 0.0
    %204 = vmatprep.subr.mxu0 0.0
    %205 = vmatpush1.msra.mxu0 0.0
    %206 = vmatprep.subr.mxu0 0.0
    %207 = vmatpush1.msra.mxu0 0.0
    %208 = vmatprep.subr.mxu0 0.0
    %209 = vmatpush1.msra.mxu0 0.0
    %210 = vmatprep.subr.mxu0 0.0
    %211 = vmatpush1.msra.mxu0 0.0
    %212 = vmatprep.subr.mxu0 0.0
    %213 = vmatpush1.msra.mxu0 0.0
    %214 = vmatprep.subr.mxu0 0.0
    %215 = vmatpush1.msra.mxu0 0.0
    %216 = vmatprep.subr.mxu0 0.0
    %217 = vmatpush1.msra.mxu0 0.0
    %218 = vmatprep.subr.mxu0 0.0
    %219 = vmatpush1.msra.mxu0 0.0
    %220 = vmatprep.subr.mxu0 0.0
    %221 = vmatpush1.msra.mxu0 0.0
    %222 = vmatprep.subr.mxu0 0.0
    %223 = vmatpush1.msra.mxu0 0.0
    %224 = vmatprep.subr.mxu0 0.0
    %225 = vmatpush1.msra.mxu0 %v85
    %226 = vmatprep.subr.mxu0 0.0
    %227 = vmatpush1.msra.mxu0 %v84
    %228 = vmatprep.subr.mxu0 0.0
    %229 = vmatpush1.msra.mxu0 %v83
    %230 = vmatprep.subr.mxu0 0.0
    %231 = vmatpush1.msra.mxu0 %v82
    %232 = vmatprep.subr.mxu0 0.0
    %233 = vmatpush2.msra.mxu0 0.0
    %234 = vmatprep.subr.mxu0 0.0
    %235 = vmatpush2.msra.mxu0 0.0
    %236 = vmatprep.subr.mxu0 0.0
    %237 = vmatpush2.msra.mxu0 0.0
    %238 = vmatprep.subr.mxu0 0.0
    %239 = vmatpush2.msra.mxu0 0.0
    %240 = vmatprep.subr.mxu0 0.0
    %241 = vmatpush2.msra.mxu0 0.0
    %242 = vmatprep.subr.mxu0 0.0
    %243 = vmatpush2.msra.mxu0 0.0
    %244 = vmatprep.subr.mxu0 0.0
    %245 = vmatpush2.msra.mxu0 0.0
    %246 = vmatprep.subr.mxu0 0.0
    %247 = vmatpush2.msra.mxu0 0.0
    %248 = vmatprep.subr.mxu0 0.0
    %249 = vmatpush2.msra.mxu0 0.0
    %250 = vmatprep.subr.mxu0 0.0
    %251 = vmatpush2.msra.mxu0 0.0
    %252 = vmatprep.subr.mxu0 0.0
    %253 = vmatpush2.msra.mxu0 0.0
    %254 = vmatprep.subr.mxu0 0.0
    %255 = vmatpush2.msra.mxu0 0.0
    %256 = vmatprep.subr.mxu0 0.0
    %257 = vmatpush2.msra.mxu0 0.0
    %258 = vmatprep.subr.mxu0 0.0
    %259 = vmatpush2.msra.mxu0 0.0
    %260 = vmatprep.subr.mxu0 0.0
    %261 = vmatpush2.msra.mxu0 0.0
    %262 = vmatprep.subr.mxu0 0.0
    %263 = vmatpush2.msra.mxu0 0.0
    %264 = vmatprep.mubr.f32.mxu0 0.0
    %265 = vmatmul.mubr.f32.gmra.mxu0 %v195
    %v266 = vpop.f32.mrf.mxu0
    %v267 = vadd.f32 %v191, %v266
    %v268 = vpop.f32.mrf.mxu0
    %269 = vmatprep.mubr.f32.mxu0 0.0
    %270 = vmatmul.mubr.f32.gmra.mxu0 %v198
    %v271 = vpop.f32.mrf.mxu0
    %v272 = vadd.f32 %v191, %v271
    %v273 = vpop.f32.mrf.mxu0
    %274 = vdwg.mxu0
    %v275 = vmax.f32 %v267, 0.0
    %v276 = vmax.f32 %v272, 0.0
    %v278 = vsel %vm193, %v275, 0
    %v281 = vsel %vm193, %v276, 0
    %283 = vmatprep.subr.mxu0 0.0
    %284 = vmatpush1.msra.mxu0 0.0
    %285 = vmatprep.subr.mxu0 0.0
    %286 = vmatpush1.msra.mxu0 0.0
    %287 = vmatprep.subr.mxu0 0.0
    %288 = vmatpush1.msra.mxu0 0.0
    %289 = vmatprep.subr.mxu0 0.0
    %290 = vmatpush1.msra.mxu0 0.0
    %291 = vmatprep.subr.mxu0 0.0
    %292 = vmatpush1.msra.mxu0 0.0
    %293 = vmatprep.subr.mxu0 0.0
    %294 = vmatpush1.msra.mxu0 0.0
    %295 = vmatprep.subr.mxu0 0.0
    %296 = vmatpush1.msra.mxu0 0.0
    %297 = vmatprep.subr.mxu0 0.0
    %298 = vmatpush1.msra.mxu0 0.0
    %299 = vmatprep.subr.mxu0 0.0
    %300 = vmatpush1.msra.mxu0 0.0
    %301 = vmatprep.subr.mxu0 0.0
    %302 = vmatpush1.msra.mxu0 0.0
    %303 = vmatprep.subr.mxu0 0.0
    %304 = vmatpush1.msra.mxu0 0.0
    %305 = vmatprep.subr.mxu0 0.0
    %306 = vmatpush1.msra.mxu0 0.0
    %307 = vmatprep.subr.mxu0 0.0
    %308 = vmatpush1.msra.mxu0 %v90
    %309 = vmatprep.subr.mxu0 0.0
    %310 = vmatpush1.msra.mxu0 %v89
    %311 = vmatprep.subr.mxu0 0.0
    %312 = vmatpush1.msra.mxu0 %v88
    %313 = vmatprep.subr.mxu0 0.0
    %314 = vmatpush1.msra.mxu0 %v87
    %315 = vmatprep.subr.mxu0 0.0
    %316 = vmatpush2.msra.mxu0 0.0
    %317 = vmatprep.subr.mxu0 0.0
    %318 = vmatpush2.msra.mxu0 0.0
    %319 = vmatprep.subr.mxu0 0.0
    %320 = vmatpush2.msra.mxu0 0.0
    %321 = vmatprep.subr.mxu0 0.0
    %322 = vmatpush2.msra.mxu0 0.0
    %323 = vmatprep.subr.mxu0 0.0
    %324 = vmatpush2.msra.mxu0 0.0
    %325 = vmatprep.subr.mxu0 0.0
    %326 = vmatpush2.msra.mxu0 0.0
    %327 = vmatprep.subr.mxu0 0.0
    %328 = vmatpush2.msra.mxu0 0.0
    %329 = vmatprep.subr.mxu0 0.0
    %330 = vmatpush2.msra.mxu0 0.0
    %331 = vmatprep.subr.mxu0 0.0
    %332 = vmatpush2.msra.mxu0 0.0
    %333 = vmatprep.subr.mxu0 0.0
    %334 = vmatpush2.msra.mxu0 0.0
    %335 = vmatprep.subr.mxu0 0.0
    %336 = vmatpush2.msra.mxu0 0.0
    %337 = vmatprep.subr.mxu0 0.0
    %338 = vmatpush2.msra.mxu0 0.0
    %339 = vmatprep.subr.mxu0 0.0
    %340 = vmatpush2.msra.mxu0 0.0
    %341 = vmatprep.subr.mxu0 0.0
    %342 = vmatpush2.msra.mxu0 0.0
    %343 = vmatprep.subr.mxu0 0.0
    %344 = vmatpush2.msra.mxu0 0.0
    %345 = vmatprep.subr.mxu0 0.0
    %346 = vmatpush2.msra.mxu0 0.0
    %347 = vmatprep.mubr.f32.mxu0 0.0
    %348 = vmatmul.mubr.f32.gmra.mxu0 %v278
    %v349 = vpop.f32.mrf.mxu0
    %v350 = vadd.f32 0.0, %v349
    %v351 = vpop.f32.mrf.mxu0
    %352 = vmatprep.mubr.f32.mxu0 0.0
    %353 = vmatmul.mubr.f32.gmra.mxu0 %v281
    %v354 = vpop.f32.mrf.mxu0
    %v355 = vadd.f32 0.0, %v354
    %v356 = vpop.f32.mrf.mxu0
    %357 = vdwg.mxu0
    %360 = vrot.lane.b32.xlu0 %v350, 4
    %v361 = vpop.permute.xlu0 %360
    %362 = vrot.lane.b32.xlu0 %v355, 4
    %v363 = vpop.permute.xlu0 %362
    %v366 = vsel %vm99, %v91, %v361
    %v367 = vsel %vm99, %v92, %v363
    %vm368 = vcmask 162816
    %369 = vst.msk [vmem:[#allocation10] sm:$0xff] %vm368, %v366
    %370 = vst.msk [vmem:[#allocation10 + $0x8] sm:$0xff] %vm368, %v367
    %v371 = vld [vmem:[#allocation2] sm:$0x3]
    %v373 = vsel %vm99, %v371, 0
    %375 = vmatprep.subr.mxu0 0.0
    %376 = vmatpush1.msra.mxu0 0.0
    %377 = vmatprep.subr.mxu0 0.0
    %378 = vmatpush1.msra.mxu0 0.0
    %379 = vmatprep.subr.mxu0 0.0
    %380 = vmatpush1.msra.mxu0 0.0
    %381 = vmatprep.subr.mxu0 0.0
    %382 = vmatpush1.msra.mxu0 0.0
    %383 = vmatprep.subr.mxu0 0.0
    %384 = vmatpush1.msra.mxu0 0.0
    %385 = vmatprep.subr.mxu0 0.0
    %386 = vmatpush1.msra.mxu0 0.0
    %387 = vmatprep.subr.mxu0 0.0
    %388 = vmatpush1.msra.mxu0 0.0
    %389 = vmatprep.subr.mxu0 0.0
    %390 = vmatpush1.msra.mxu0 0.0
    %391 = vmatprep.subr.mxu0 0.0
    %392 = vmatpush1.msra.mxu0 0.0
    %393 = vmatprep.subr.mxu0 0.0
    %394 = vmatpush1.msra.mxu0 0.0
    %395 = vmatprep.subr.mxu0 0.0
    %396 = vmatpush1.msra.mxu0 0.0
    %397 = vmatprep.subr.mxu0 0.0
    %398 = vmatpush1.msra.mxu0 0.0
    %399 = vmatprep.subr.mxu0 0.0
    %400 = vmatpush1.msra.mxu0 0.0
    %401 = vmatprep.subr.mxu0 0.0
    %402 = vmatpush1.msra.mxu0 0.0
    %403 = vmatprep.subr.mxu0 0.0
    %404 = vmatpush1.msra.mxu0 0.0
    %405 = vmatprep.subr.mxu0 0.0
    %406 = vmatpush1.msra.mxu0 %v108
    %407 = vmatprep.subr.mxu0 0.0
    %408 = vmatpush2.msra.mxu0 0.0
    %409 = vmatprep.subr.mxu0 0.0
    %410 = vmatpush2.msra.mxu0 0.0
    %411 = vmatprep.subr.mxu0 0.0
    %412 = vmatpush2.msra.mxu0 0.0
    %413 = vmatprep.subr.mxu0 0.0
    %414 = vmatpush2.msra.mxu0 0.0
    %415 = vmatprep.subr.mxu0 0.0
    %416 = vmatpush2.msra.mxu0 0.0
    %417 = vmatprep.subr.mxu0 0.0
    %418 = vmatpush2.msra.mxu0 0.0
    %419 = vmatprep.subr.mxu0 0.0
    %420 = vmatpush2.msra.mxu0 0.0
    %421 = vmatprep.subr.mxu0 0.0
    %422 = vmatpush2.msra.mxu0 0.0
    %423 = vmatprep.subr.mxu0 0.0
    %424 = vmatpush2.msra.mxu0 0.0
    %425 = vmatprep.subr.mxu0 0.0
    %426 = vmatpush2.msra.mxu0 0.0
    %427 = vmatprep.subr.mxu0 0.0
    %428 = vmatpush2.msra.mxu0 0.0
    %429 = vmatprep.subr.mxu0 0.0
    %430 = vmatpush2.msra.mxu0 0.0
    %431 = vmatprep.subr.mxu0 0.0
    %432 = vmatpush2.msra.mxu0 0.0
    %433 = vmatprep.subr.mxu0 0.0
    %434 = vmatpush2.msra.mxu0 0.0
    %435 = vmatprep.subr.mxu0 0.0
    %436 = vmatpush2.msra.mxu0 0.0
    %437 = vmatprep.subr.mxu0 0.0
    %438 = vmatpush2.msra.mxu0 0.0
    %439 = vmatprep.mubr.f32.mxu0 0.0
    %440 = vmatmul.mubr.f32.gmra.mxu0 %v373
    %v441 = vpop.f32.mrf.mxu0
    %v442 = vadd.f32 %v97, %v441
    %v443 = vpop.f32.mrf.mxu0
    %444 = vdwg.mxu0
    %v445 = vmax.f32 %v442, 0.0
    %v447 = vsel %vm193, %v445, 0
    %449 = vmatprep.subr.mxu0 0.0
    %450 = vmatpush1.msra.mxu0 0.0
    %451 = vmatprep.subr.mxu0 0.0
    %452 = vmatpush1.msra.mxu0 0.0
    %453 = vmatprep.subr.mxu0 0.0
    %454 = vmatpush1.msra.mxu0 0.0
    %455 = vmatprep.subr.mxu0 0.0
    %456 = vmatpush1.msra.mxu0 0.0
    %457 = vmatprep.subr.mxu0 0.0
    %458 = vmatpush1.msra.mxu0 0.0
    %459 = vmatprep.subr.mxu0 0.0
    %460 = vmatpush1.msra.mxu0 0.0
    %461 = vmatprep.subr.mxu0 0.0
    %462 = vmatpush1.msra.mxu0 0.0
    %463 = vmatprep.subr.mxu0 0.0
    %464 = vmatpush1.msra.mxu0 0.0
    %465 = vmatprep.subr.mxu0 0.0
    %466 = vmatpush1.msra.mxu0 0.0
    %467 = vmatprep.subr.mxu0 0.0
    %468 = vmatpush1.msra.mxu0 0.0
    %469 = vmatprep.subr.mxu0 0.0
    %470 = vmatpush1.msra.mxu0 0.0
    %471 = vmatprep.subr.mxu0 0.0
    %472 = vmatpush1.msra.mxu0 0.0
    %473 = vmatprep.subr.mxu0 0.0
    %474 = vmatpush1.msra.mxu0 %v85
    %475 = vmatprep.subr.mxu0 0.0
    %476 = vmatpush1.msra.mxu0 %v84
    %477 = vmatprep.subr.mxu0 0.0
    %478 = vmatpush1.msra.mxu0 %v83
    %479 = vmatprep.subr.mxu0 0.0
    %480 = vmatpush1.msra.mxu0 %v82
    %481 = vmatprep.subr.mxu0 0.0
    %482 = vmatpush2.msra.mxu0 0.0
    %483 = vmatprep.subr.mxu0 0.0
    %484 = vmatpush2.msra.mxu0 0.0
    %485 = vmatprep.subr.mxu0 0.0
    %486 = vmatpush2.msra.mxu0 0.0
    %487 = vmatprep.subr.mxu0 0.0
    %488 = vmatpush2.msra.mxu0 0.0
    %489 = vmatprep.subr.mxu0 0.0
    %490 = vmatpush2.msra.mxu0 0.0
    %491 = vmatprep.subr.mxu0 0.0
    %492 = vmatpush2.msra.mxu0 0.0
    %493 = vmatprep.subr.mxu0 0.0
    %494 = vmatpush2.msra.mxu0 0.0
    %495 = vmatprep.subr.mxu0 0.0
    %496 = vmatpush2.msra.mxu0 0.0
    %497 = vmatprep.subr.mxu0 0.0
    %498 = vmatpush2.msra.mxu0 0.0
    %499 = vmatprep.subr.mxu0 0.0
    %500 = vmatpush2.msra.mxu0 0.0
    %501 = vmatprep.subr.mxu0 0.0
    %502 = vmatpush2.msra.mxu0 0.0
    %503 = vmatprep.subr.mxu0 0.0
    %504 = vmatpush2.msra.mxu0 0.0
    %505 = vmatprep.subr.mxu0 0.0
    %506 = vmatpush2.msra.mxu0 0.0
    %507 = vmatprep.subr.mxu0 0.0
    %508 = vmatpush2.msra.mxu0 0.0
    %509 = vmatprep.subr.mxu0 0.0
    %510 = vmatpush2.msra.mxu0 0.0
    %511 = vmatprep.subr.mxu0 0.0
    %512 = vmatpush2.msra.mxu0 0.0
    %513 = vmatprep.mubr.f32.mxu0 0.0
    %514 = vmatmul.mubr.f32.gmra.mxu0 %v447
    %v515 = vpop.f32.mrf.mxu0
    %v516 = vadd.f32 %v191, %v515
    %v517 = vpop.f32.mrf.mxu0
    %518 = vdwg.mxu0
    %v519 = vmax.f32 %v516, 0.0
    %v521 = vsel %vm193, %v519, 0
    %523 = vmatprep.subr.mxu0 0.0
    %524 = vmatpush1.msra.mxu0 0.0
    %525 = vmatprep.subr.mxu0 0.0
    %526 = vmatpush1.msra.mxu0 0.0
    %527 = vmatprep.subr.mxu0 0.0
    %528 = vmatpush1.msra.mxu0 0.0
    %529 = vmatprep.subr.mxu0 0.0
    %530 = vmatpush1.msra.mxu0 0.0
    %531 = vmatprep.subr.mxu0 0.0
    %532 = vmatpush1.msra.mxu0 0.0
    %533 = vmatprep.subr.mxu0 0.0
    %534 = vmatpush1.msra.mxu0 0.0
    %535 = vmatprep.subr.mxu0 0.0
    %536 = vmatpush1.msra.mxu0 0.0
    %537 = vmatprep.subr.mxu0 0.0
    %538 = vmatpush1.msra.mxu0 0.0
    %539 = vmatprep.subr.mxu0 0.0
    %540 = vmatpush1.msra.mxu0 0.0
    %541 = vmatprep.subr.mxu0 0.0
    %542 = vmatpush1.msra.mxu0 0.0
    %543 = vmatprep.subr.mxu0 0.0
    %544 = vmatpush1.msra.mxu0 0.0
    %545 = vmatprep.subr.mxu0 0.0
    %546 = vmatpush1.msra.mxu0 0.0
    %547 = vmatprep.subr.mxu0 0.0
    %548 = vmatpush1.msra.mxu0 %v90
    %549 = vmatprep.subr.mxu0 0.0
    %550 = vmatpush1.msra.mxu0 %v89
    %551 = vmatprep.subr.mxu0 0.0
    %552 = vmatpush1.msra.mxu0 %v88
    %553 = vmatprep.subr.mxu0 0.0
    %554 = vmatpush1.msra.mxu0 %v87
    %555 = vmatprep.subr.mxu0 0.0
    %556 = vmatpush2.msra.mxu0 0.0
    %557 = vmatprep.subr.mxu0 0.0
    %558 = vmatpush2.msra.mxu0 0.0
    %559 = vmatprep.subr.mxu0 0.0
    %560 = vmatpush2.msra.mxu0 0.0
    %561 = vmatprep.subr.mxu0 0.0
    %562 = vmatpush2.msra.mxu0 0.0
    %563 = vmatprep.subr.mxu0 0.0
    %564 = vmatpush2.msra.mxu0 0.0
    %565 = vmatprep.subr.mxu0 0.0
    %566 = vmatpush2.msra.mxu0 0.0
    %567 = vmatprep.subr.mxu0 0.0
    %568 = vmatpush2.msra.mxu0 0.0
    %569 = vmatprep.subr.mxu0 0.0
    %570 = vmatpush2.msra.mxu0 0.0
    %571 = vmatprep.subr.mxu0 0.0
    %572 = vmatpush2.msra.mxu0 0.0
    %573 = vmatprep.subr.mxu0 0.0
    %574 = vmatpush2.msra.mxu0 0.0
    %575 = vmatprep.subr.mxu0 0.0
    %576 = vmatpush2.msra.mxu0 0.0
    %577 = vmatprep.subr.mxu0 0.0
    %578 = vmatpush2.msra.mxu0 0.0
    %579 = vmatprep.subr.mxu0 0.0
    %580 = vmatpush2.msra.mxu0 0.0
    %581 = vmatprep.subr.mxu0 0.0
    %582 = vmatpush2.msra.mxu0 0.0
    %583 = vmatprep.subr.mxu0 0.0
    %584 = vmatpush2.msra.mxu0 0.0
    %585 = vmatprep.subr.mxu0 0.0
    %586 = vmatpush2.msra.mxu0 0.0
    %587 = vmatprep.mubr.f32.mxu0 0.0
    %588 = vmatmul.mubr.f32.gmra.mxu0 %v521
    %v589 = vpop.f32.mrf.mxu0
    %v590 = vadd.f32 0.0, %v589
    %v591 = vpop.f32.mrf.mxu0
    %592 = vdwg.mxu0
    %594 = vrot.lane.b32.xlu0 %v590, 4
    %v595 = vpop.permute.xlu0 %594
    %v597 = vsel %vm99, %v371, %v595
    %v598 = vld [vmem:[%s7] sm:$0xff]
    %v599 = vld [vmem:[%s7 + $0x8] sm:$0xff]
    %v600 = vld [vmem:[%s7 + $0x10] sm:$0xff]
    %v601 = vld [vmem:[%s7 + $0x18] sm:$0xff]
    %v602 = vld [vmem:[%s7 + $0x20] sm:$0xf]
    %v603 = vld [vmem:[%s7 + $0x28] sm:$0xf]
    %v605 = vsel %vm368, %v597, 0
    %v608 = vsel %vm106, %v602, 0
    %v611 = vsel %vm106, %v603, 0
    %613 = vmatprep.subr.mxu0 0.0
    %614 = vmatpush1.msra.mxu0 0.0
    %615 = vmatprep.subr.mxu0 0.0
    %616 = vmatpush1.msra.mxu0 0.0
    %617 = vmatprep.subr.mxu0 0.0
    %618 = vmatpush1.msra.mxu0 0.0
    %619 = vmatprep.subr.mxu0 0.0
    %620 = vmatpush1.msra.mxu0 0.0
    %621 = vmatprep.subr.mxu0 0.0
    %622 = vmatpush1.msra.mxu0 0.0
    %623 = vmatprep.subr.mxu0 0.0
    %624 = vmatpush1.msra.mxu0 0.0
    %625 = vmatprep.subr.mxu0 0.0
    %626 = vmatpush1.msra.mxu0 0.0
    %627 = vmatprep.subr.mxu0 0.0
    %628 = vmatpush1.msra.mxu0 0.0
    %629 = vmatprep.subr.mxu0 0.0
    %630 = vmatpush1.msra.mxu0 0.0
    %631 = vmatprep.subr.mxu0 0.0
    %632 = vmatpush1.msra.mxu0 0.0
    %633 = vmatprep.subr.mxu0 0.0
    %634 = vmatpush1.msra.mxu0 0.0
    %635 = vmatprep.subr.mxu0 0.0
    %636 = vmatpush1.msra.mxu0 0.0
    %637 = vmatprep.subr.mxu0 0.0
    %638 = vmatpush1.msra.mxu0 0.0
    %639 = vmatprep.subr.mxu0 %v611
    %640 = vmatpush1.msra.mxu0 %v608
    %641 = vmatprep.subr.mxu0 %v601
    %642 = vmatpush1.msra.mxu0 %v600
    %643 = vmatprep.subr.mxu0 %v599
    %644 = vmatpush1.msra.mxu0 %v598
    %645 = vmatprep.subr.mxu0 0.0
    %646 = vmatpush2.msra.mxu0 0.0
    %647 = vmatprep.subr.mxu0 0.0
    %648 = vmatpush2.msra.mxu0 0.0
    %649 = vmatprep.subr.mxu0 0.0
    %650 = vmatpush2.msra.mxu0 0.0
    %651 = vmatprep.subr.mxu0 0.0
    %652 = vmatpush2.msra.mxu0 0.0
    %653 = vmatprep.subr.mxu0 0.0
    %654 = vmatpush2.msra.mxu0 0.0
    %655 = vmatprep.subr.mxu0 0.0
    %656 = vmatpush2.msra.mxu0 0.0
    %657 = vmatprep.subr.mxu0 0.0
    %658 = vmatpush2.msra.mxu0 0.0
    %659 = vmatprep.subr.mxu0 0.0
    %660 = vmatpush2.msra.mxu0 0.0
    %661 = vmatprep.subr.mxu0 0.0
    %662 = vmatpush2.msra.mxu0 0.0
    %663 = vmatprep.subr.mxu0 0.0
    %664 = vmatpush2.msra.mxu0 0.0
    %665 = vmatprep.subr.mxu0 0.0
    %666 = vmatpush2.msra.mxu0 0.0
    %667 = vmatprep.subr.mxu0 0.0
    %668 = vmatpush2.msra.mxu0 0.0
    %669 = vmatprep.subr.mxu0 0.0
    %670 = vmatpush2.msra.mxu0 0.0
    %671 = vmatprep.subr.mxu0 0.0
    %672 = vmatpush2.msra.mxu0 0.0
    %673 = vmatprep.subr.mxu0 0.0
    %674 = vmatpush2.msra.mxu0 0.0
    %675 = vmatprep.subr.mxu0 0.0
    %676 = vmatpush2.msra.mxu0 0.0
    %677 = vmatprep.mubr.f32.mxu0 0.0
    %678 = vmatmul.mubr.f32.gmra.mxu0 %v605
    %v679 = vpop.f32.mrf.mxu0
    %v680 = vadd.f32 0.0, %v679
    %v681 = vpop.f32.mrf.mxu0
    %v682 = vadd.f32 0.0, %v681
    %683 = vdwg.mxu0
    %v686 = vcombine.low %v680, %v682
    %v688 = vunpack.c.l.s4 1983009808
    %v689 = vunpack.c.0.s8 %v688
    %v690 = vlaneseq
    %v691 = vshrl.u32 %v690, 7
    %v692 = vsub.s32 %v689, %v691
    %v693 = vrot.slane %v686, %v692
    %vm695 = vcmask 1041408
    %vm696 = vcmask 257026
    %vm697 = vmor %vm696, %vm695
    %698 = vst.msk [vmem:[#allocation11] sm:$0xf] %vm697, %v693
    // Predicated region
    $region50: #{tpu_custom_call.1} parent=1 // pred_check
      _
    $region51: #{tpu_custom_call.1} parent=1 // pred_check_branch
      %700 = sbr.rel (0) target = $region53
    $region52: #{tpu_custom_call.1} parent=1 // pred_region
      %s702 = ssub.s32 256, 256
      %703 = vsyncadd [#allocation4], %s702
      %s704 = sshll.u32 [#allocation10], 4
      %s705 = int_to_ptr.vmem [resolvable:$true] %s704
      %710 = dma.vmem_to_hbm [thread:$0]  %s705, 256, %s8, [#allocation4], 128, 128, 8
    $region53: #{tpu_custom_call.1} parent=1 // pred_fallthru
      _
    // Predicated region
    $region54: #{tpu_custom_call.1} parent=1 // pred_check
      _
    $region55: #{tpu_custom_call.1} parent=1 // pred_check_branch
      %712 = sbr.rel (0) target = $region57
    $region56: #{tpu_custom_call.1} parent=1 // pred_region
      %s714 = ssub.s32 64, 64
      %715 = vsyncadd [#allocation12], %s714
      %s717 = sshll.u32 [#allocation11], 4
      %s718 = int_to_ptr.vmem [resolvable:$true] %s717
      %720 = dma.vmem_to_hbm [thread:$0]  %s718, 64, %s9, [#allocation12]
    $region57: #{tpu_custom_call.1} parent=1 // pred_fallthru
      _
    // Predicated region
    $region58: #{tpu_custom_call.1} parent=1 // pred_check
      _
    $region59: #{tpu_custom_call.1} parent=1 // pred_check_branch
      %722 = sbr.rel (0) target = $region61
    $region60: #{tpu_custom_call.1} parent=1 // pred_region
      %723 = dma.done [#allocation4], 256
    $region61: #{tpu_custom_call.1} parent=1 // pred_fallthru
      _
    // Predicated region
    $region62: #{tpu_custom_call.1} parent=1 // pred_check
      _
    $region63: #{tpu_custom_call.1} parent=1 // pred_check_branch
      %725 = sbr.rel (0) target = $region65
    $region64: #{tpu_custom_call.1} parent=1 // pred_region
      %726 = dma.done [#allocation12], 64
    $region65: #{tpu_custom_call.1} parent=1 // pred_fallthru
      _
    %727 = vsyncpa [#allocation3], 1
    %728 = vsyncpa [#allocation6], 1
    %729 = vsyncpa [#allocation9], 1
    %730 = vsyncpa [#allocation4], 1
    %731 = vsyncpa [#allocation12], 1

</llo_original>
